<compile_context>
chip_gen: v7x
topology: tpu7x:2x2x1
jax: 0.10.0
libtpu: 0.0.40
codegen_flags: <defaults>
</compile_context>

<pallas_src>
import functools

import jax
import jax.numpy as jnp
from jax.experimental import pallas as pl
from jax.experimental.pallas import tpu as pltpu

_EPS = 1e-6            # torch.nn.functional.pairwise_distance default eps

_LANE = 128
_SUBLANE = 8
_MAX_TILE_ROWS = 32768     # batch rows per grid step (sublane dim)
_MIN_TILE_ROWS = 512       # keep at least this many rows before tiling the feature dim
_SPLIT_THRESHOLD = 4096    # split single-block batches >= this so v7x's 2 TCs both get work


def _round_up(x, m):
    return (x + m - 1) // m * m


def _vmem_budgets():
    """(input_budget_bytes, vmem_limit_bytes) derived from this chip's VMEM capacity."""
    try:
        cap = pltpu.get_tpu_info().vmem_capacity_bytes
    except Exception:  # interpret mode / unknown target -> assume 128 MiB parts
        cap = 128 * 1024 * 1024
    vmem_limit = min((cap * 5) // 8, 96 * 1024 * 1024)   # ~40 MiB on v7x, ~80 MiB on v5e/v6e
    input_budget = cap // 4                              # ~16 MiB on v7x, ~32 MiB on v5e/v6e
    return int(input_budget), int(vmem_limit)


def _pick_tiles(batch, feat, dtype, input_budget):
    """Choose (tile_rows, n_row_chunks, tile_cols, n_col_chunks)."""
    itemsize = jnp.dtype(dtype).itemsize
    per_elem = 4 * itemsize          # 2 embedding inputs x 2 pipeline buffers

    # Feature tiling: keep full-extent D when a _MIN_TILE_ROWS-row block fits the
    # input budget; otherwise tile D (multiple of 128) and accumulate sq_dist.
    if per_elem * feat * _MIN_TILE_ROWS <= input_budget:
        td = feat
    else:
        td = max(_LANE, (input_budget // (per_elem * _MIN_TILE_ROWS)) // _LANE * _LANE)
        if td >= feat:
            td = feat
    n_d = 1 if td == feat else pl.cdiv(feat, td)

    per_row = per_elem * td
    tb = min(_MAX_TILE_ROWS,
             max(_SUBLANE, (input_budget // per_row) // _SUBLANE * _SUBLANE))

    if batch <= tb:
        if batch >= _SPLIT_THRESHOLD:
            # Guarantee >= 2 chunks so the "parallel" axis feeds both v7x TensorCores.
            tb = _round_up(pl.cdiv(batch, 2), _SUBLANE)
        else:
            return batch, 1, td, n_d   # single full-extent batch block (any size OK)
    return tb, pl.cdiv(batch, tb), td, n_d


def _contrastive_loss_kernel(emb1_ref, emb2_ref, label_ref, out_ref, acc_ref, *,
                             batch_size, feat_size, margin):
    # emb refs: (TB, TD) in input dtype; label_ref: (TB, 1) f32;
    # out_ref: (1, 1, 128) f32 per-batch-chunk partial sum; acc_ref: (TB, 1) f32 scratch.
    bi = pl.program_id(0)
    di = pl.program_id(1)
    tb, td = emb1_ref.shape

    @pl.when(di == 0)
    def _():
        acc_ref[...] = jnp.zeros_like(acc_ref)

    e1 = emb1_ref[...].astype(jnp.float32)
    e2 = emb2_ref[...].astype(jnp.float32)
    diff = e1 - e2 + _EPS                                        # eps like torch pairwise_distance
    # Mask lanes past the true feature dim (ragged last D tile is undefined padding).
    col = di * td + jax.lax.broadcasted_iota(jnp.int32, (tb, td), 1)
    diff = jnp.where(col < feat_size, diff, 0.0)
    acc_ref[...] += jnp.sum(diff * diff, axis=-1, keepdims=True)  # (TB, 1) cross-lane reduce (XLU)

    @pl.when(di == pl.num_programs(1) - 1)
    def _():
        sq_dist = acc_ref[...]                                   # (TB, 1)
        dist = jnp.sqrt(sq_dist)                                 # EUP
        label = label_ref[...]                                   # (TB, 1)
        hinge = jnp.maximum(margin - dist, 0.0)
        loss = (1.0 - label) * sq_dist + label * (hinge * hinge)
        # Mask rows past the true batch (select, NOT multiply-mask: padding may be NaN/Inf).
        row = bi * tb + jax.lax.broadcasted_iota(jnp.int32, (tb, 1), 0)
        loss = jnp.where(row < batch_size, loss, 0.0)
        out_ref[...] = jnp.broadcast_to(jnp.sum(loss).reshape(1, 1, 1), (1, 1, _LANE))


def contrastive_loss(emb1, emb2, label, margin=1.0, *, tile_rows=None, tile_cols=None):
    batch, feat = emb1.shape
    input_budget, vmem_limit = _vmem_budgets()
    tb, n_b, td, n_d = _pick_tiles(batch, feat, emb1.dtype, input_budget)

    # Manual overrides (test hooks).
    if tile_rows is not None:
        tb = int(tile_rows)
        if batch <= tb:
            tb, n_b = batch, 1
        else:
            tb = _round_up(tb, _SUBLANE)
            n_b = pl.cdiv(batch, tb)
    if tile_cols is not None:
        td = int(tile_cols)
        if feat <= td:
            td, n_d = feat, 1
        else:
            td = _round_up(td, _LANE)
            n_d = pl.cdiv(feat, td)

    # Embeddings stay in their native (B, D) layout / dtype; only the tiny label
    # vector is reshaped to a (B, 1) column.
    label_col = label.astype(jnp.float32).reshape(batch, 1)

    kernel = functools.partial(
        _contrastive_loss_kernel,
        batch_size=batch, feat_size=feat, margin=float(margin))

    partials = pl.pallas_call(
        kernel,
        out_shape=jax.ShapeDtypeStruct((n_b, 1, _LANE), jnp.float32),
        grid=(n_b, n_d),
        in_specs=[
            pl.BlockSpec((tb, td), lambda bi, di: (bi, di)),
            pl.BlockSpec((tb, td), lambda bi, di: (bi, di)),
            pl.BlockSpec((tb, 1), lambda bi, di: (bi, 0)),
        ],
        out_specs=pl.BlockSpec((1, 1, _LANE), lambda bi, di: (bi, 0, 0)),
        scratch_shapes=[pltpu.VMEM((tb, 1), jnp.float32)],
        compiler_params=pltpu.CompilerParams(
            dimension_semantics=("parallel", "arbitrary"),
            vmem_limit_bytes=vmem_limit,
        ),
    )(emb1, emb2, label_col)

    return jnp.sum(partials[:, 0, 0]) / batch


def _reference(emb1, emb2, label, margin=1.0):
    diff = emb1.astype(jnp.float32) - emb2.astype(jnp.float32) + _EPS
    dist = jnp.sqrt(jnp.sum(diff * diff, axis=-1))
    label = label.astype(jnp.float32)
    loss = (1.0 - label) * dist ** 2 + label * jnp.maximum(margin - dist, 0.0) ** 2
    return jnp.mean(loss)


if __name__ == "__main__":
    key = jax.random.PRNGKey(0)
    k1, k2, k3, k4, k5, k6, k7, k8, k9 = jax.random.split(key, 9)

    # 1) Small shapes consistent with the module: batch of 32-d embedding pairs.
    B, D = 8, 32
    emb1 = jax.random.normal(k1, (B, D), dtype=jnp.float32)
    emb2 = jax.random.normal(k2, (B, D), dtype=jnp.float32)
    label = jax.random.bernoulli(k3, 0.5, (B,)).astype(jnp.float32)

    out = jax.block_until_ready(contrastive_loss(emb1, emb2, label))
    ref = _reference(emb1, emb2, label)
    assert jnp.allclose(out, ref, atol=1e-5, rtol=1e-4), (out, ref)

    # 2) Multi-chunk batch + ragged last batch tile (in-kernel row mask, divide by true B).
    B2, D2 = 300, 32
    emb1b = jax.random.normal(k4, (B2, D2), dtype=jnp.float32)
    emb2b = jax.random.normal(k5, (B2, D2), dtype=jnp.float32)
    labelb = jax.random.bernoulli(k6, 0.5, (B2,)).astype(jnp.float32)

    out2 = jax.block_until_ready(contrastive_loss(emb1b, emb2b, labelb, tile_rows=128))
    ref2 = _reference(emb1b, emb2b, labelb)
    assert jnp.allclose(out2, ref2, atol=1e-5, rtol=1e-4), (out2, ref2)

    # 3) Feature-dim tiling path: accumulate sq_dist over D chunks + ragged last D tile.
    B3, D3 = 64, 200
    emb1c = jax.random.normal(k7, (B3, D3), dtype=jnp.float32)
    emb2c = jax.random.normal(k8, (B3, D3), dtype=jnp.float32)
    labelc = jax.random.bernoulli(k9, 0.5, (B3,)).astype(jnp.float32)

    out3 = jax.block_until_ready(contrastive_loss(emb1c, emb2c, labelc, tile_cols=128))
    ref3 = _reference(emb1c, emb2c, labelc)
    assert jnp.allclose(out3, ref3, atol=1e-5, rtol=1e-4), (out3, ref3)

    print("KERNEL_OK")
</pallas_src>

<mosaic_0001>
module attributes {stable_mosaic.version = 11 : i64} {
  func.func @_contrastive_loss_kernel(%arg0: i32, %arg1: i32, %arg2: memref<8x32xf32, #tpu.memory_space<vmem>>, %arg3: memref<8x32xf32, #tpu.memory_space<vmem>>, %arg4: memref<8x1xf32, #tpu.memory_space<vmem>>, %arg5: memref<1x1x128xf32, #tpu.memory_space<vmem>>, %arg6: memref<8x1xf32, #tpu.memory_space<vmem>>) attributes {dimension_semantics = [#tpu.dimension_semantics<parallel>, #tpu.dimension_semantics<arbitrary>], iteration_bounds = array<i64: 1, 1>, scalar_prefetch = 0 : i64, scratch_operands = 1 : i64, tpu.core_type = #tpu.core_type<tc>, window_params = [{transform_indices = @transform_0, window_bounds = array<i64: 8, 32>}, {transform_indices = @transform_1, window_bounds = array<i64: 8, 32>}, {transform_indices = @transform_2, window_bounds = array<i64: 8, 1>}, {transform_indices = @transform_3, window_bounds = array<i64: 1, 1, 128>}]} {
    %c0_i32 = arith.constant 0 : i32
    %0 = arith.cmpi eq, %arg1, %c0_i32 : i32
    %1 = arith.extui %0 : i1 to i32
    %c0_i32_0 = arith.constant 0 : i32
    %2 = arith.cmpi ne, %1, %c0_i32_0 : i32
    scf.if %2 {
      %cst_13 = arith.constant 0.000000e+00 : f32
      %25 = vector.broadcast %cst_13 : f32 to vector<8x1xf32>
      %c0_14 = arith.constant 0 : index
      %c0_15 = arith.constant 0 : index
      %26 = vector.load %arg6[%c0_14, %c0_15] : memref<8x1xf32, #tpu.memory_space<vmem>>, vector<8x1xf32>
      tpu.vector_store %arg6[%c0_14, %c0_15], %25 {strides = array<i32>} : memref<8x1xf32, #tpu.memory_space<vmem>>, vector<8x1xf32>,
    } else {
    }
    %c0 = arith.constant 0 : index
    %c0_1 = arith.constant 0 : index
    %3 = vector.load %arg2[%c0, %c0_1] : memref<8x32xf32, #tpu.memory_space<vmem>>, vector<8x32xf32>
    %c0_2 = arith.constant 0 : index
    %c0_3 = arith.constant 0 : index
    %4 = vector.load %arg3[%c0_2, %c0_3] : memref<8x32xf32, #tpu.memory_space<vmem>>, vector<8x32xf32>
    %5 = arith.subf %3, %4 : vector<8x32xf32>
    %cst = arith.constant 9.99999997E-7 : f32
    %6 = vector.broadcast %cst : f32 to vector<8x32xf32>
    %7 = arith.addf %5, %6 : vector<8x32xf32>
    %c32_i32 = arith.constant 32 : i32
    %8 = arith.muli %arg1, %c32_i32 : i32
    %9 = tpu.iota {dimensions = array<i32: 1>} : vector<8x32xi32>
    %10 = vector.broadcast %8 : i32 to vector<8x32xi32>
    %11 = arith.addi %10, %9 : vector<8x32xi32>
    %c32_i32_4 = arith.constant 32 : i32
    %12 = vector.broadcast %c32_i32_4 : i32 to vector<8x32xi32>
    %13 = arith.cmpi slt, %11, %12 : vector<8x32xi32>
    %cst_5 = arith.constant 0.000000e+00 : f32
    %14 = vector.broadcast %cst_5 : f32 to vector<8x32xf32>
    %15 = arith.select %13, %7, %14 : vector<8x32xi1>, vector<8x32xf32>
    %c0_6 = arith.constant 0 : index
    %c0_7 = arith.constant 0 : index
    %16 = vector.load %arg6[%c0_6, %c0_7] : memref<8x1xf32, #tpu.memory_space<vmem>>, vector<8x1xf32>
    %17 = arith.mulf %15, %15 : vector<8x32xf32>
    %cst_8 = arith.constant dense<0.000000e+00> : vector<8xf32>
    %18 = vector.multi_reduction <add>, %17, %cst_8 [1] : vector<8x32xf32> to vector<8xf32>
    %19 = vector.shape_cast %18 : vector<8xf32> to vector<8x1xf32>
    %20 = arith.addf %16, %19 : vector<8x1xf32>
    %c0_9 = arith.constant 0 : index
    %c0_10 = arith.constant 0 : index
    %21 = vector.load %arg6[%c0_9, %c0_10] : memref<8x1xf32, #tpu.memory_space<vmem>>, vector<8x1xf32>
    tpu.vector_store %arg6[%c0_9, %c0_10], %20 {strides = array<i32>} : memref<8x1xf32, #tpu.memory_space<vmem>>, vector<8x1xf32>,
    %c0_i32_11 = arith.constant 0 : i32
    %22 = arith.cmpi eq, %arg1, %c0_i32_11 : i32
    %23 = arith.extui %22 : i1 to i32
    %c0_i32_12 = arith.constant 0 : i32
    %24 = arith.cmpi ne, %23, %c0_i32_12 : i32
    scf.if %24 {
      %c0_13 = arith.constant 0 : index
      %c0_14 = arith.constant 0 : index
      %25 = vector.load %arg6[%c0_13, %c0_14] : memref<8x1xf32, #tpu.memory_space<vmem>>, vector<8x1xf32>
      %26 = math.sqrt %25 : vector<8x1xf32>
      %c0_15 = arith.constant 0 : index
      %c0_16 = arith.constant 0 : index
      %27 = vector.load %arg4[%c0_15, %c0_16] : memref<8x1xf32, #tpu.memory_space<vmem>>, vector<8x1xf32>
      %cst_17 = arith.constant 1.000000e+00 : f32
      %28 = vector.broadcast %cst_17 : f32 to vector<8x1xf32>
      %29 = arith.subf %28, %26 : vector<8x1xf32>
      %cst_18 = arith.constant 0.000000e+00 : f32
      %30 = vector.broadcast %cst_18 : f32 to vector<8x1xf32>
      %31 = arith.maximumf %29, %30 : vector<8x1xf32>
      %cst_19 = arith.constant 1.000000e+00 : f32
      %32 = vector.broadcast %cst_19 : f32 to vector<8x1xf32>
      %33 = arith.subf %32, %27 : vector<8x1xf32>
      %34 = arith.mulf %33, %25 : vector<8x1xf32>
      %35 = arith.mulf %31, %31 : vector<8x1xf32>
      %36 = arith.mulf %27, %35 : vector<8x1xf32>
      %37 = arith.addf %34, %36 : vector<8x1xf32>
      %c8_i32 = arith.constant 8 : i32
      %38 = arith.muli %arg0, %c8_i32 : i32
      %39 = tpu.iota {dimensions = array<i32: 0>} : vector<8x1xi32>
      %40 = vector.broadcast %38 : i32 to vector<8x1xi32>
      %41 = arith.addi %40, %39 : vector<8x1xi32>
      %c8_i32_20 = arith.constant 8 : i32
      %42 = vector.broadcast %c8_i32_20 : i32 to vector<8x1xi32>
      %43 = arith.cmpi slt, %41, %42 : vector<8x1xi32>
      %cst_21 = arith.constant 0.000000e+00 : f32
      %44 = vector.broadcast %cst_21 : f32 to vector<8x1xf32>
      %45 = arith.select %43, %37, %44 : vector<8x1xi1>, vector<8x1xf32>
      %46 = vector.shape_cast %45 : vector<8x1xf32> to vector<1x8x1xf32>
      %cst_22 = arith.constant dense<0.000000e+00> : vector<1xf32>
      %47 = vector.multi_reduction <add>, %46, %cst_22 [1, 2] : vector<1x8x1xf32> to vector<1xf32>
      %48 = vector.shape_cast %47 : vector<1xf32> to vector<1x1x1xf32>
      %49 = vector.extract %48[0, 0, 0] : f32 from vector<1x1x1xf32>
      %50 = vector.broadcast %49 : f32 to vector<1x1x1xf32>
      %51 = vector.shape_cast %50 : vector<1x1x1xf32> to vector<1x1x1xf32>
      %52 = vector.broadcast %51 : vector<1x1x1xf32> to vector<1x1x128xf32>
      %c0_23 = arith.constant 0 : index
      %c0_24 = arith.constant 0 : index
      %c0_25 = arith.constant 0 : index
      %53 = vector.load %arg5[%c0_23, %c0_24, %c0_25] : memref<1x1x128xf32, #tpu.memory_space<vmem>>, vector<1x1x128xf32>
      tpu.vector_store %arg5[%c0_23, %c0_24, %c0_25], %52 {strides = array<i32>} : memref<1x1x128xf32, #tpu.memory_space<vmem>>, vector<1x1x128xf32>,
    } else {
    }
    return
  }
  func.func @transform_0(%arg0: i32, %arg1: i32) -> (i32, i32) {
    %c0_i32 = arith.constant 0 : i32
    return %arg0, %arg1 : i32, i32
  }
  func.func @transform_1(%arg0: i32, %arg1: i32) -> (i32, i32) {
    %c0_i32 = arith.constant 0 : i32
    return %arg0, %arg1 : i32, i32
  }
  func.func @transform_2(%arg0: i32, %arg1: i32) -> (i32, i32) {
    %c0_i32 = arith.constant 0 : i32
    %c0_i32_0 = arith.constant 0 : i32
    return %arg0, %c0_i32 : i32, i32
  }
  func.func @transform_3(%arg0: i32, %arg1: i32) -> (i32, i32, i32) {
    %c0_i32 = arith.constant 0 : i32
    %c0_i32_0 = arith.constant 0 : i32
    %c0_i32_1 = arith.constant 0 : i32
    return %arg0, %c0_i32, %c0_i32_0 : i32, i32, i32
  }
}

</mosaic_0001>

<llo_original>
// kernel: tpu_custom_call.1
$region0: #{tpu_custom_call.1}
  #allocation0 [shape = 'u32[]', space=smem, size = 0x4, offset = 0x4, fixed_abs, tag = 'smem constant byte address 0x4 - core index']
  #allocation1 [shape = 'u32[144,128]{1,0:T(1,128)}', space=vmem, size = 0x12000, scoped, tag = 'internal scratch']
  #allocation2 [shape = 'f32[8,1]{1,0:T(8,128)}', space=vmem, size = 0x1000, scoped, tag = 'scratch operand']
  %s0 = inlined_call_operand.hbm [shape: f32[8,32], index: 0, kind: input, shape index: {}]
  %s1 = inlined_call_operand.hbm [shape: f32[8,32], index: 1, kind: input, shape index: {}]
  %s2 = inlined_call_operand.hbm [shape: f32[8,1], index: 2, kind: input, shape index: {}]
  %s3 = inlined_call_operand.hbm [shape: f32[1,1,128], index: 3, kind: output, shape index: {}]
  %s4 = sld [smem:[#allocation0]]
  $region42: #{tpu_custom_call.1} parent=0
    _
  %s6 = ssub.s32 1, %s4
  %s7 = scalar_select 0, %s6, %s4
  $region1: #{tpu_custom_call.1} parent=0
    #allocation3 [shape = 'u8[4096]{0}', space=vmem, size = 0x1000, scoped, tag = 'input window, operand 0, single buffered']
    #allocation4 [shape = 's32[1]{0}', space=sflag, size = 0x4, scoped, tag = 'scoped memory for tpu_custom_call.1']
    #allocation5 [shape = 's32[1]{0}', space=sflag, size = 0x4, scoped, tag = 'scoped memory for tpu_custom_call.1']
    #allocation6 [shape = 'u8[4096]{0}', space=vmem, size = 0x1000, scoped, tag = 'input window, operand 1, single buffered']
    #allocation7 [shape = 's32[1]{0}', space=sflag, size = 0x4, scoped, tag = 'scoped memory for tpu_custom_call.1']
    #allocation8 [shape = 'u8[4096]{0}', space=vmem, size = 0x1000, scoped, tag = 'input window, operand 2, single buffered']
    #allocation9 [shape = 'u8[512]{0}', space=vmem, size = 0x400, scoped, tag = 'output window, operand 0, single buffered']
    %8 = vsyncpa [#allocation4], 0
    %9 = vsyncpa [#allocation7], 0
    %10 = vsyncpa [#allocation5], 0
    // Predicated region
    $region2: #{tpu_custom_call.1} parent=1 // pred_check
      _
    $region3: #{tpu_custom_call.1} parent=1 // pred_check_branch
      %12 = sbr.rel (0) target = $region5
    $region4: #{tpu_custom_call.1} parent=1 // pred_region
      %s14 = ssub.s32 128, 128
      %15 = vsyncadd [#allocation4], %s14
      %s17 = sshll.u32 [#allocation3], 4
      %s18 = int_to_ptr.vmem [resolvable:$true] %s17
      %20 = dma.hbm_to_vmem [thread:$0]  %s0, 128, %s18, [#allocation4]
    $region5: #{tpu_custom_call.1} parent=1 // pred_fallthru
      _
    // Predicated region
    $region6: #{tpu_custom_call.1} parent=1 // pred_check
      _
    $region7: #{tpu_custom_call.1} parent=1 // pred_check_branch
      %22 = sbr.rel (0) target = $region9
    $region8: #{tpu_custom_call.1} parent=1 // pred_region
      %s24 = ssub.s32 128, 128
      %25 = vsyncadd [#allocation7], %s24
      %s27 = sshll.u32 [#allocation6], 4
      %s28 = int_to_ptr.vmem [resolvable:$true] %s27
      %30 = dma.hbm_to_vmem [thread:$0]  %s1, 128, %s28, [#allocation7]
    $region9: #{tpu_custom_call.1} parent=1 // pred_fallthru
      _
    // Predicated region
    $region10: #{tpu_custom_call.1} parent=1 // pred_check
      _
    $region11: #{tpu_custom_call.1} parent=1 // pred_check_branch
      %32 = sbr.rel (0) target = $region13
    $region12: #{tpu_custom_call.1} parent=1 // pred_region
      %s34 = ssub.s32 128, 128
      %35 = vsyncadd [#allocation7], %s34
      %s37 = sshll.u32 [#allocation8], 4
      %s38 = int_to_ptr.vmem [resolvable:$true] %s37
      %40 = dma.hbm_to_vmem [thread:$0]  %s2, 128, %s38, [#allocation7]
    $region13: #{tpu_custom_call.1} parent=1 // pred_fallthru
      _
    // Predicated region
    $region14: #{tpu_custom_call.1} parent=1 // pred_check
      _
    $region15: #{tpu_custom_call.1} parent=1 // pred_check_branch
      %42 = sbr.rel (0) target = $region17
    $region16: #{tpu_custom_call.1} parent=1 // pred_region
      %43 = dma.done [#allocation4], 128
    $region17: #{tpu_custom_call.1} parent=1 // pred_fallthru
      _
    // Predicated region
    $region18: #{tpu_custom_call.1} parent=1 // pred_check
      _
    $region19: #{tpu_custom_call.1} parent=1 // pred_check_branch
      %45 = sbr.rel (0) target = $region21
    $region20: #{tpu_custom_call.1} parent=1 // pred_region
      %46 = dma.done [#allocation7], 128
    $region21: #{tpu_custom_call.1} parent=1 // pred_fallthru
      _
    // Predicated region
    $region22: #{tpu_custom_call.1} parent=1 // pred_check
      _
    $region23: #{tpu_custom_call.1} parent=1 // pred_check_branch
      %48 = sbr.rel (0) target = $region25
    $region24: #{tpu_custom_call.1} parent=1 // pred_region
      %49 = dma.done [#allocation7], 128
    $region25: #{tpu_custom_call.1} parent=1 // pred_fallthru
      _
    %p50 = scmp.eq.s32.totalorder 0, 0
    // Predicated region
    $region26: #{tpu_custom_call.1} parent=1 // pred_check
      %p51 = pneg %p50
    $region27: #{tpu_custom_call.1} parent=1 // pred_check_branch
      %53 = sbr.rel (%p51) target = $region29
    $region28: #{tpu_custom_call.1} parent=1 // pred_region
      %vm54 = vcmask 7168
      %55 = vst.msk [vmem:[#allocation2] sm:$0xff] %vm54, 0.0
    $region29: #{tpu_custom_call.1} parent=1 // pred_fallthru
      _
    %v56 = vld [vmem:[#allocation3] sm:$0xff]
    %v57 = vld [vmem:[#allocation6] sm:$0xff]
    %v58 = vsub.f32 %v56, %v57
    %v59 = vadd.f32 %v58, 1e-06
    %s60 = smul.u32 0, 32
    %v61 = vlaneseq
    %v62 = vand.u32 %v61, 127
    %v63 = vstv %s60
    %v64 = vadd.s32 %v63, %v62
    %vm65 = vcmp.lt.s32.totalorder %v64, 32
    %v66 = vsel %vm65, %v59, 0.0
    %v67 = vld [vmem:[#allocation2] sm:$0xff]
    %v68 = vmul.f32 %v66, %v66
    %vm69 = vcmask 261120
    %v70 = vsel %vm69, %v68, 0.0
    %71 = vadd.xlane.f32.xlu0 %v70
    %v72 = vpop.xlane.xlu0 %71
    %v73 = vadd.f32 %v67, %v72
    %vm74 = vcmask 7168
    %75 = vst.msk [vmem:[#allocation2] sm:$0xff] %vm74, %v73
    // Predicated region
    $region30: #{tpu_custom_call.1} parent=1 // pred_check
      %p76 = pneg %p50
    $region31: #{tpu_custom_call.1} parent=1 // pred_check_branch
      %78 = sbr.rel (%p76) target = $region33
    $region32: #{tpu_custom_call.1} parent=1 // pred_region
      %v79 = vld [vmem:[#allocation2] sm:$0xff]
      %v80 = vrsqrt.pop %v79
      %v81 = vmul.f32 %v79, %v80
      %vm82 = vcmp.eq.f32.partialorder %v79, inf
      %v83 = vsel %vm82, %v79, %v81
      %vm84 = vcmp.eq.f32.partialorder %v79, 0.0
      %v85 = vand.u32 %v79, 2147483648
      %v86 = vsel %vm84, %v85, %v83
      %v87 = vld [vmem:[#allocation8] sm:$0xff]
      %v88 = vsub.f32 1.0, %v86
      %v89 = vmax.f32 %v88, 0.0
      %v90 = vsub.f32 1.0, %v87
      %v91 = vmul.f32 %v90, %v79
      %v92 = vmul.f32 %v89, %v89
      %v93 = vmul.f32 %v87, %v92
      %v94 = vadd.f32 %v91, %v93
      %s95 = smul.u32 0, 8
      %v96 = vlaneseq
      %v97 = vshrl.u32 %v96, 7
      %v98 = vstv %s95
      %v99 = vadd.s32 %v98, %v97
      %vm100 = vcmp.lt.s32.totalorder %v99, 8
      %v101 = vsel %vm100, %v94, 0.0
      %v102 = vsel %vm74, %v101, 0.0
      %103 = vadd.xlane.f32.xlu0 %v102
      %v104 = vpop.xlane.xlu0 %103
      %v105 = vrot.slane %v104, 4
      %v106 = vadd.f32 %v104, %v105
      %v107 = vrot.slane %v106, 2
      %v108 = vadd.f32 %v106, %v107
      %v109 = vrot.slane %v108, 1
      %v110 = vadd.f32 %v108, %v109
      %s111 = vtos %v110
      %v112 = vstv %s111
      %113 = vst [vmem:[#allocation9] sm:$0x1] %v112
    $region33: #{tpu_custom_call.1} parent=1 // pred_fallthru
      _
    // Predicated region
    $region34: #{tpu_custom_call.1} parent=1 // pred_check
      _
    $region35: #{tpu_custom_call.1} parent=1 // pred_check_branch
      %115 = sbr.rel (0) target = $region37
    $region36: #{tpu_custom_call.1} parent=1 // pred_region
      %s117 = ssub.s32 16, 16
      %118 = vsyncadd [#allocation5], %s117
      %s120 = sshll.u32 [#allocation9], 4
      %s121 = int_to_ptr.vmem [resolvable:$true] %s120
      %123 = dma.vmem_to_hbm [thread:$0]  %s121, 16, %s3, [#allocation5]
    $region37: #{tpu_custom_call.1} parent=1 // pred_fallthru
      _
    // Predicated region
    $region38: #{tpu_custom_call.1} parent=1 // pred_check
      _
    $region39: #{tpu_custom_call.1} parent=1 // pred_check_branch
      %125 = sbr.rel (0) target = $region41
    $region40: #{tpu_custom_call.1} parent=1 // pred_region
      %126 = dma.done [#allocation5], 16
    $region41: #{tpu_custom_call.1} parent=1 // pred_fallthru
      _
    %127 = vsyncpa [#allocation4], 1
    %128 = vsyncpa [#allocation7], 1
    %129 = vsyncpa [#allocation5], 1

</llo_original>
